<compile_context>
chip_gen: v7x
topology: tpu7x:2x2x1
jax: 0.10.0
libtpu: 0.0.40
codegen_flags: <defaults>
</compile_context>

<pallas_src>
import functools

import jax
import jax.numpy as jnp
from jax import lax
from jax.experimental import pallas as pl
from jax.experimental.pallas import tpu as pltpu

EPS = 1e-6


def _round_up(n, m):
    return (n + m - 1) // m * m


def _block_diag(a, b):
    za = jnp.zeros((a.shape[0], b.shape[1]), a.dtype)
    zb = jnp.zeros((b.shape[0], a.shape[1]), a.dtype)
    top = jnp.concatenate([a, za], axis=1)
    bot = jnp.concatenate([zb, b], axis=1)
    return jnp.concatenate([top, bot], axis=0)


def _linear(a, w_ref, b_ref):
    # Matmul operands in the weight dtype (f32 or bf16); accumulate + bias in f32.
    return (jnp.dot(a.astype(w_ref.dtype), w_ref[...],
                    preferred_element_type=jnp.float32)
            + b_ref[...].astype(jnp.float32))


def mdn_kernel(x_ref,
               w1_ref, b1_ref, w2_ref, b2_ref,
               w3a_ref, b3a_ref, w3b_ref, b3b_ref,
               w4_ref, b4_ref, w5_ref, b5_ref,
               out_ref, *, n_components, dim_out):
    K = n_components
    KD = n_components * dim_out

    x = x_ref[...]

    # ---- fused base + pi trunks ----
    hp = jnp.maximum(_linear(x, w1_ref, b1_ref), 0.0)          # [h1 | p1]
    hp = jnp.maximum(_linear(hp, w2_ref, b2_ref), 0.0)         # [h2 | p2]
    shared = jnp.maximum(_linear(hp, w3a_ref, b3a_ref), 0.0)   # (TB, H)
    # pi logits already in lanes [0:K] of a full-width row; pad lanes have a
    # -1e30 bias so they vanish in the softmax.
    pis = _linear(hp, w3b_ref, b3b_ref)                        # (TB, OUT_PAD)

    # ---- log_softmax over the full row (f32); pad lanes contribute exp(-1e30)=0
    m = jnp.max(pis, axis=-1, keepdims=True)
    shifted = pis - m
    lse = jnp.log(jnp.sum(jnp.exp(shifted), axis=-1, keepdims=True))
    log_pi = shifted - lse                                     # valid in lanes [0:K]

    # ---- fused mu / sigma heads; W5 columns pre-shifted so mu | sigma_logits
    #      land at their final lane offsets in the output slab.
    msh = jnp.maximum(_linear(shared, w4_ref, b4_ref), 0.0)    # [mh | sh]
    ms = _linear(msh, w5_ref, b5_ref)                          # [0 | mu | sig_logits | 0]

    lane = lax.broadcasted_iota(jnp.int32, ms.shape, 1)
    is_pi = lane < K
    is_sigma = (lane >= K + KD) & (lane < K + 2 * KD)
    # sigma = exp(sigma_logits + eps), matching the PyTorch module exactly.
    out = jnp.where(is_sigma, jnp.exp(ms + EPS), ms)
    out = jnp.where(is_pi, log_pi, out)
    out_ref[...] = out.astype(out_ref.dtype)                   # single unmasked 128-wide store


def pack_params(params, n_components, dim_out, compute_dtype=jnp.bfloat16):
    """Fuse the 10 PyTorch linears into 6 wide, lane-aligned matmuls (once)."""
    (w0, b0, w1, b1, w2, b2,
     wm0, bm0, wm1, bm1,
     ws0, bs0, ws1, bs1,
     wp0, bp0, wp1, bp1, wp2, bp2) = params
    K, D = n_components, dim_out
    KD = K * D
    OUT_PAD = _round_up(K + 2 * KD, 128)
    H = w0.shape[1]
    cd = compute_dtype

    # L1: x @ [w0 | wp0] -> [h1 | p1]
    W1 = jnp.concatenate([w0, wp0], axis=1).astype(cd)
    B1 = jnp.concatenate([b0, bp0], axis=1)
    # L2: block-diag fusion of base / pi second layers (pays while 2H <= MXU
    # contraction width: 128 v5e, 256 v6e/v7x).
    W2 = _block_diag(w1, wp1).astype(cd)
    B2 = jnp.concatenate([b1, bp1], axis=1)
    # L3a: shared = relu([h2|p2] @ [w2; 0] + b2)   (width H, no slicing needed)
    W3a = jnp.concatenate([w2, jnp.zeros((H, H), w2.dtype)], axis=0).astype(cd)
    B3a = b2
    # L3b: pi logits at lanes [0:K] of a full OUT_PAD-wide row; pad lanes get a
    # -1e30 bias so log_softmax ignores them.
    W3b = jnp.zeros((2 * H, OUT_PAD), jnp.float32).at[H:, :K].set(wp2).astype(cd)
    B3b = jnp.full((1, OUT_PAD), -1e30, jnp.float32).at[:, :K].set(bp2)
    # L4: shared @ [wm0 | ws0] -> [mh | sh]
    W4 = jnp.concatenate([wm0, ws0], axis=1).astype(cd)
    B4 = jnp.concatenate([bm0, bs0], axis=1)
    # L5: mu / sigma_logits at their FINAL lane offsets in the output slab
    # (lanes [K:K+KD] and [K+KD:K+2KD]) -> no per-step concat / lane shuffles.
    W5 = jnp.zeros((2 * H, OUT_PAD), jnp.float32)
    W5 = W5.at[:H, K:K + KD].set(wm1)
    W5 = W5.at[H:, K + KD:K + 2 * KD].set(ws1)
    W5 = W5.astype(cd)
    B5 = jnp.zeros((1, OUT_PAD), jnp.float32)
    B5 = B5.at[:, K:K + KD].set(bm1)
    B5 = B5.at[:, K + KD:K + 2 * KD].set(bs1)
    return (W1, B1, W2, B2, W3a, B3a, W3b, B3b, W4, B4, W5, B5)


def _choose_tile(batch, max_tile=1024, min_steps=2):
    """Balanced batch tile: near-full tiles, >= min_steps grid steps for
    non-tiny batches (v7x megacore split), capped at max_tile rows/step."""
    b8 = _round_up(batch, 8)
    if b8 <= 8 * min_steps:
        return b8, b8
    n_steps = max(min_steps, pl.cdiv(b8, max_tile))
    tb = _round_up(pl.cdiv(b8, n_steps), 8)
    b_pad = _round_up(b8, tb)
    return tb, b_pad


def mdn_forward(x, packed, n_components, dim_out, max_batch_tile=1024):
    """x: (B, dim_in). packed: output of pack_params. Returns (log_pi, mu, sigma)."""
    B, dim_in = x.shape
    K, D = n_components, dim_out
    KD = K * D
    OUT_PAD = _round_up(K + 2 * KD, 128)
    compute_dtype = packed[0].dtype

    TB, B_pad = _choose_tile(B, max_batch_tile)
    x_p = x.astype(compute_dtype)
    if B_pad != B:
        x_p = jnp.pad(x_p, ((0, B_pad - B), (0, 0)))

    grid = (B_pad // TB,)

    def resident(shape):
        nd = len(shape)
        return pl.BlockSpec(shape, lambda i, _nd=nd: (0,) * _nd)

    in_specs = [pl.BlockSpec((TB, dim_in), lambda i: (i, 0))]      # x tile
    in_specs += [resident(p.shape) for p in packed]                # VMEM-resident params
    out_specs = pl.BlockSpec((TB, OUT_PAD), lambda i: (i, 0))      # lane-dense slab

    flops = 2 * B_pad * sum(int(w.shape[0]) * int(w.shape[1]) for w in packed[0::2])
    bytes_accessed = int(x_p.size * x_p.dtype.itemsize
                         + sum(int(p.size) * p.dtype.itemsize for p in packed)
                         + B_pad * OUT_PAD * 4)
    cost = pl.CostEstimate(flops=flops,
                           transcendentals=int(B_pad * (2 * OUT_PAD + 1)),
                           bytes_accessed=bytes_accessed)

    kernel = functools.partial(mdn_kernel, n_components=K, dim_out=D)

    out = pl.pallas_call(
        kernel,
        out_shape=jax.ShapeDtypeStruct((B_pad, OUT_PAD), jnp.float32),
        grid=grid,
        in_specs=in_specs,
        out_specs=out_specs,
        compiler_params=pltpu.CompilerParams(
            dimension_semantics=("parallel",)),   # megacore split on v7x
        cost_estimate=cost,
    )(x_p, *packed)

    log_pi = out[:B, :K]
    mu = out[:B, K:K + KD].reshape(B, K, D)
    sigma = out[:B, K + KD:K + 2 * KD].reshape(B, K, D)
    return log_pi, mu, sigma


def init_params(key, dim_in, dim_out, n_components, hidden_dim):
    """Deterministic synthetic parameters. Weights are (in, out), biases (1, out)."""
    layer_shapes = [
        # base
        (dim_in, hidden_dim), (hidden_dim, hidden_dim), (hidden_dim, hidden_dim),
        # mu_head
        (hidden_dim, hidden_dim), (hidden_dim, dim_out * n_components),
        # sigma_head
        (hidden_dim, hidden_dim), (hidden_dim, dim_out * n_components),
        # pi_head
        (dim_in, hidden_dim), (hidden_dim, hidden_dim), (hidden_dim, n_components),
    ]
    params = []
    for i, (fan_in, fan_out) in enumerate(layer_shapes):
        kw, kb = jax.random.split(jax.random.fold_in(key, i))
        scale = 1.0 / jnp.sqrt(jnp.float32(fan_in))
        w = jax.random.uniform(kw, (fan_in, fan_out), jnp.float32, -scale, scale)
        b = jax.random.uniform(kb, (1, fan_out), jnp.float32, -scale, scale)
        params.extend([w, b])
    return params


def mdn_reference(x, params, n_components, dim_out):
    """Pure-JAX reference (mirrors the PyTorch module) for correctness checking."""
    (w0, b0, w1, b1, w2, b2,
     wm0, bm0, wm1, bm1,
     ws0, bs0, ws1, bs1,
     wp0, bp0, wp1, bp1, wp2, bp2) = params
    relu = lambda v: jnp.maximum(v, 0.0)
    h = relu(x @ w0 + b0)
    h = relu(h @ w1 + b1)
    shared = relu(h @ w2 + b2)
    p = relu(x @ wp0 + bp0)
    p = relu(p @ wp1 + bp1)
    pis = p @ wp2 + bp2
    log_pi = jax.nn.log_softmax(pis, axis=-1)
    mu = (relu(shared @ wm0 + bm0) @ wm1 + bm1).reshape(-1, n_components, dim_out)
    sigma = jnp.exp(relu(shared @ ws0 + bs0) @ ws1 + bs1 + EPS).reshape(
        -1, n_components, dim_out)
    return log_pi, mu, sigma


if __name__ == "__main__":
    DIM_IN, DIM_OUT, K, HIDDEN = 32, 8, 4, 32
    B_SMALL, B_LARGE = 8, 300

    key = jax.random.PRNGKey(0)
    kx, kx2, kp = jax.random.split(key, 3)
    x_small = jax.random.normal(kx, (B_SMALL, DIM_IN), jnp.float32)
    x_large = jax.random.normal(kx2, (B_LARGE, DIM_IN), jnp.float32)
    params = init_params(kp, DIM_IN, DIM_OUT, K, HIDDEN)

    # ---- f32 path: exact validation against the pure-JAX reference ----
    packed_f32 = pack_params(params, K, DIM_OUT, compute_dtype=jnp.float32)
    for xb in (x_small, x_large):
        B = xb.shape[0]
        log_pi, mu, sigma = mdn_forward(xb, packed_f32, K, DIM_OUT)
        jax.block_until_ready((log_pi, mu, sigma))
        r_log_pi, r_mu, r_sigma = mdn_reference(xb, params, K, DIM_OUT)
        assert log_pi.shape == (B, K)
        assert mu.shape == (B, K, DIM_OUT) and sigma.shape == (B, K, DIM_OUT)
        assert jnp.allclose(log_pi, r_log_pi, atol=1e-5)
        assert jnp.allclose(mu, r_mu, atol=1e-5)
        assert jnp.allclose(sigma, r_sigma, atol=1e-5)

    # ---- bf16 path (default on v5e/v6e/v7x): matmul operands in bf16, all
    #      elementwise math (relu / log_softmax / exp / bias) in f32. Looser
    #      tolerances because operands are quantized before the MXU.
    packed_bf16 = pack_params(params, K, DIM_OUT)   # default compute_dtype=bf16
    b_log_pi, b_mu, b_sigma = mdn_forward(x_small, packed_bf16, K, DIM_OUT)
    jax.block_until_ready((b_log_pi, b_mu, b_sigma))
    r_log_pi, r_mu, r_sigma = mdn_reference(x_small, params, K, DIM_OUT)
    assert jnp.allclose(b_log_pi, r_log_pi, atol=1e-1, rtol=1e-1)
    assert jnp.allclose(b_mu, r_mu, atol=1e-1, rtol=1e-1)
    assert jnp.allclose(b_sigma, r_sigma, atol=1e-1, rtol=1e-1)

    print("KERNEL_OK")
</pallas_src>

<mosaic_0001>
module attributes {stable_mosaic.version = 11 : i64} {
  func.func @mdn_kernel(%arg0: i32, %arg1: memref<8x32xf32, #tpu.memory_space<vmem>>, %arg2: memref<32x64xf32, #tpu.memory_space<vmem>>, %arg3: memref<1x64xf32, #tpu.memory_space<vmem>>, %arg4: memref<64x64xf32, #tpu.memory_space<vmem>>, %arg5: memref<1x64xf32, #tpu.memory_space<vmem>>, %arg6: memref<64x32xf32, #tpu.memory_space<vmem>>, %arg7: memref<1x32xf32, #tpu.memory_space<vmem>>, %arg8: memref<64x128xf32, #tpu.memory_space<vmem>>, %arg9: memref<1x128xf32, #tpu.memory_space<vmem>>, %arg10: memref<32x64xf32, #tpu.memory_space<vmem>>, %arg11: memref<1x64xf32, #tpu.memory_space<vmem>>, %arg12: memref<64x128xf32, #tpu.memory_space<vmem>>, %arg13: memref<1x128xf32, #tpu.memory_space<vmem>>, %arg14: memref<8x128xf32, #tpu.memory_space<vmem>>) attributes {dimension_semantics = [#tpu.dimension_semantics<parallel>], iteration_bounds = array<i64: 1>, scalar_prefetch = 0 : i64, scratch_operands = 0 : i64, tpu.core_type = #tpu.core_type<tc>, window_params = [{transform_indices = @transform_0, window_bounds = array<i64: 8, 32>}, {pipeline_mode = #tpu.pipeline_mode<synchronous>, transform_indices = @transform_1, window_bounds = array<i64: 32, 64>}, {pipeline_mode = #tpu.pipeline_mode<synchronous>, transform_indices = @transform_2, window_bounds = array<i64: 1, 64>}, {pipeline_mode = #tpu.pipeline_mode<synchronous>, transform_indices = @transform_3, window_bounds = array<i64: 64, 64>}, {pipeline_mode = #tpu.pipeline_mode<synchronous>, transform_indices = @transform_4, window_bounds = array<i64: 1, 64>}, {pipeline_mode = #tpu.pipeline_mode<synchronous>, transform_indices = @transform_5, window_bounds = array<i64: 64, 32>}, {pipeline_mode = #tpu.pipeline_mode<synchronous>, transform_indices = @transform_6, window_bounds = array<i64: 1, 32>}, {pipeline_mode = #tpu.pipeline_mode<synchronous>, transform_indices = @transform_7, window_bounds = array<i64: 64, 128>}, {pipeline_mode = #tpu.pipeline_mode<synchronous>, transform_indices = @transform_8, window_bounds = array<i64: 1, 128>}, {pipeline_mode = #tpu.pipeline_mode<synchronous>, transform_indices = @transform_9, window_bounds = array<i64: 32, 64>}, {pipeline_mode = #tpu.pipeline_mode<synchronous>, transform_indices = @transform_10, window_bounds = array<i64: 1, 64>}, {pipeline_mode = #tpu.pipeline_mode<synchronous>, transform_indices = @transform_11, window_bounds = array<i64: 64, 128>}, {pipeline_mode = #tpu.pipeline_mode<synchronous>, transform_indices = @transform_12, window_bounds = array<i64: 1, 128>}, {transform_indices = @transform_13, window_bounds = array<i64: 8, 128>}]} {
    %c0 = arith.constant 0 : index
    %c0_0 = arith.constant 0 : index
    %0 = vector.load %arg1[%c0, %c0_0] : memref<8x32xf32, #tpu.memory_space<vmem>>, vector<8x32xf32>
    %c0_1 = arith.constant 0 : index
    %c0_2 = arith.constant 0 : index
    %1 = vector.load %arg2[%c0_1, %c0_2] : memref<32x64xf32, #tpu.memory_space<vmem>>, vector<32x64xf32>
    %cst = arith.constant dense<0.000000e+00> : vector<8x64xf32>
    %2 = tpu.matmul %0, %1, %cst {dimension_numbers = #tpu.dot_dimension_numbers<[1], [0], [0], [1], [0, 0, 1, 1], [], []>} : vector<8x32xf32>, vector<32x64xf32>, vector<8x64xf32> -> vector<8x64xf32>
    %c0_3 = arith.constant 0 : index
    %c0_4 = arith.constant 0 : index
    %3 = vector.load %arg3[%c0_3, %c0_4] : memref<1x64xf32, #tpu.memory_space<vmem>>, vector<1x64xf32>
    %4 = vector.broadcast %3 : vector<1x64xf32> to vector<8x64xf32>
    %5 = arith.addf %2, %4 : vector<8x64xf32>
    %cst_5 = arith.constant 0.000000e+00 : f32
    %6 = vector.broadcast %cst_5 : f32 to vector<8x64xf32>
    %7 = arith.maximumf %5, %6 : vector<8x64xf32>
    %c0_6 = arith.constant 0 : index
    %c0_7 = arith.constant 0 : index
    %8 = vector.load %arg4[%c0_6, %c0_7] : memref<64x64xf32, #tpu.memory_space<vmem>>, vector<64x64xf32>
    %cst_8 = arith.constant dense<0.000000e+00> : vector<8x64xf32>
    %9 = tpu.matmul %7, %8, %cst_8 {dimension_numbers = #tpu.dot_dimension_numbers<[1], [0], [0], [1], [0, 0, 1, 1], [], []>} : vector<8x64xf32>, vector<64x64xf32>, vector<8x64xf32> -> vector<8x64xf32>
    %c0_9 = arith.constant 0 : index
    %c0_10 = arith.constant 0 : index
    %10 = vector.load %arg5[%c0_9, %c0_10] : memref<1x64xf32, #tpu.memory_space<vmem>>, vector<1x64xf32>
    %11 = vector.broadcast %10 : vector<1x64xf32> to vector<8x64xf32>
    %12 = arith.addf %9, %11 : vector<8x64xf32>
    %cst_11 = arith.constant 0.000000e+00 : f32
    %13 = vector.broadcast %cst_11 : f32 to vector<8x64xf32>
    %14 = arith.maximumf %12, %13 : vector<8x64xf32>
    %c0_12 = arith.constant 0 : index
    %c0_13 = arith.constant 0 : index
    %15 = vector.load %arg6[%c0_12, %c0_13] : memref<64x32xf32, #tpu.memory_space<vmem>>, vector<64x32xf32>
    %cst_14 = arith.constant dense<0.000000e+00> : vector<8x32xf32>
    %16 = tpu.matmul %14, %15, %cst_14 {dimension_numbers = #tpu.dot_dimension_numbers<[1], [0], [0], [1], [0, 0, 1, 1], [], []>} : vector<8x64xf32>, vector<64x32xf32>, vector<8x32xf32> -> vector<8x32xf32>
    %c0_15 = arith.constant 0 : index
    %c0_16 = arith.constant 0 : index
    %17 = vector.load %arg7[%c0_15, %c0_16] : memref<1x32xf32, #tpu.memory_space<vmem>>, vector<1x32xf32>
    %18 = vector.broadcast %17 : vector<1x32xf32> to vector<8x32xf32>
    %19 = arith.addf %16, %18 : vector<8x32xf32>
    %cst_17 = arith.constant 0.000000e+00 : f32
    %20 = vector.broadcast %cst_17 : f32 to vector<8x32xf32>
    %21 = arith.maximumf %19, %20 : vector<8x32xf32>
    %c0_18 = arith.constant 0 : index
    %c0_19 = arith.constant 0 : index
    %22 = vector.load %arg8[%c0_18, %c0_19] : memref<64x128xf32, #tpu.memory_space<vmem>>, vector<64x128xf32>
    %cst_20 = arith.constant dense<0.000000e+00> : vector<8x128xf32>
    %23 = tpu.matmul %14, %22, %cst_20 {dimension_numbers = #tpu.dot_dimension_numbers<[1], [0], [0], [1], [0, 0, 1, 1], [], []>} : vector<8x64xf32>, vector<64x128xf32>, vector<8x128xf32> -> vector<8x128xf32>
    %c0_21 = arith.constant 0 : index
    %c0_22 = arith.constant 0 : index
    %24 = vector.load %arg9[%c0_21, %c0_22] : memref<1x128xf32, #tpu.memory_space<vmem>>, vector<1x128xf32>
    %25 = vector.broadcast %24 : vector<1x128xf32> to vector<8x128xf32>
    %26 = arith.addf %23, %25 : vector<8x128xf32>
    %cst_23 = arith.constant dense<0xFF800000> : vector<8xf32>
    %27 = vector.multi_reduction <maximumf>, %26, %cst_23 [1] : vector<8x128xf32> to vector<8xf32>
    %28 = vector.shape_cast %27 : vector<8xf32> to vector<8x1xf32>
    %29 = vector.broadcast %28 : vector<8x1xf32> to vector<8x128xf32>
    %30 = arith.subf %26, %29 : vector<8x128xf32>
    %31 = math.exp %30 : vector<8x128xf32>
    %cst_24 = arith.constant dense<0.000000e+00> : vector<8xf32>
    %32 = vector.multi_reduction <add>, %31, %cst_24 [1] : vector<8x128xf32> to vector<8xf32>
    %33 = vector.shape_cast %32 : vector<8xf32> to vector<8x1xf32>
    %34 = math.log %33 : vector<8x1xf32>
    %35 = vector.broadcast %34 : vector<8x1xf32> to vector<8x128xf32>
    %36 = arith.subf %30, %35 : vector<8x128xf32>
    %c0_25 = arith.constant 0 : index
    %c0_26 = arith.constant 0 : index
    %37 = vector.load %arg10[%c0_25, %c0_26] : memref<32x64xf32, #tpu.memory_space<vmem>>, vector<32x64xf32>
    %cst_27 = arith.constant dense<0.000000e+00> : vector<8x64xf32>
    %38 = tpu.matmul %21, %37, %cst_27 {dimension_numbers = #tpu.dot_dimension_numbers<[1], [0], [0], [1], [0, 0, 1, 1], [], []>} : vector<8x32xf32>, vector<32x64xf32>, vector<8x64xf32> -> vector<8x64xf32>
    %c0_28 = arith.constant 0 : index
    %c0_29 = arith.constant 0 : index
    %39 = vector.load %arg11[%c0_28, %c0_29] : memref<1x64xf32, #tpu.memory_space<vmem>>, vector<1x64xf32>
    %40 = vector.broadcast %39 : vector<1x64xf32> to vector<8x64xf32>
    %41 = arith.addf %38, %40 : vector<8x64xf32>
    %cst_30 = arith.constant 0.000000e+00 : f32
    %42 = vector.broadcast %cst_30 : f32 to vector<8x64xf32>
    %43 = arith.maximumf %41, %42 : vector<8x64xf32>
    %c0_31 = arith.constant 0 : index
    %c0_32 = arith.constant 0 : index
    %44 = vector.load %arg12[%c0_31, %c0_32] : memref<64x128xf32, #tpu.memory_space<vmem>>, vector<64x128xf32>
    %cst_33 = arith.constant dense<0.000000e+00> : vector<8x128xf32>
    %45 = tpu.matmul %43, %44, %cst_33 {dimension_numbers = #tpu.dot_dimension_numbers<[1], [0], [0], [1], [0, 0, 1, 1], [], []>} : vector<8x64xf32>, vector<64x128xf32>, vector<8x128xf32> -> vector<8x128xf32>
    %c0_34 = arith.constant 0 : index
    %c0_35 = arith.constant 0 : index
    %46 = vector.load %arg13[%c0_34, %c0_35] : memref<1x128xf32, #tpu.memory_space<vmem>>, vector<1x128xf32>
    %47 = vector.broadcast %46 : vector<1x128xf32> to vector<8x128xf32>
    %48 = arith.addf %45, %47 : vector<8x128xf32>
    %49 = tpu.iota {dimensions = array<i32: 1>} : vector<8x128xi32>
    %c4_i32 = arith.constant 4 : i32
    %50 = vector.broadcast %c4_i32 : i32 to vector<8x128xi32>
    %51 = arith.cmpi slt, %49, %50 : vector<8x128xi32>
    %c36_i32 = arith.constant 36 : i32
    %52 = vector.broadcast %c36_i32 : i32 to vector<8x128xi32>
    %53 = arith.cmpi sge, %49, %52 : vector<8x128xi32>
    %c68_i32 = arith.constant 68 : i32
    %54 = vector.broadcast %c68_i32 : i32 to vector<8x128xi32>
    %55 = arith.cmpi slt, %49, %54 : vector<8x128xi32>
    %56 = arith.andi %53, %55 : vector<8x128xi1>
    %cst_36 = arith.constant 9.99999997E-7 : f32
    %57 = vector.broadcast %cst_36 : f32 to vector<8x128xf32>
    %58 = arith.addf %48, %57 : vector<8x128xf32>
    %59 = math.exp %58 : vector<8x128xf32>
    %60 = arith.select %56, %59, %48 : vector<8x128xi1>, vector<8x128xf32>
    %61 = arith.select %51, %36, %60 : vector<8x128xi1>, vector<8x128xf32>
    %c0_37 = arith.constant 0 : index
    %c0_38 = arith.constant 0 : index
    %62 = vector.load %arg14[%c0_37, %c0_38] : memref<8x128xf32, #tpu.memory_space<vmem>>, vector<8x128xf32>
    tpu.vector_store %arg14[%c0_37, %c0_38], %61 {strides = array<i32>} : memref<8x128xf32, #tpu.memory_space<vmem>>, vector<8x128xf32>,
    return
  }
  func.func @transform_0(%arg0: i32) -> (i32, i32) {
    %c0_i32 = arith.constant 0 : i32
    %c0_i32_0 = arith.constant 0 : i32
    return %arg0, %c0_i32 : i32, i32
  }
  func.func @transform_1(%arg0: i32) -> (i32, i32) {
    %c0_i32 = arith.constant 0 : i32
    %c0_i32_0 = arith.constant 0 : i32
    %c0_i32_1 = arith.constant 0 : i32
    return %c0_i32, %c0_i32_0 : i32, i32
  }
  func.func @transform_2(%arg0: i32) -> (i32, i32) {
    %c0_i32 = arith.constant 0 : i32
    %c0_i32_0 = arith.constant 0 : i32
    %c0_i32_1 = arith.constant 0 : i32
    return %c0_i32, %c0_i32_0 : i32, i32
  }
  func.func @transform_3(%arg0: i32) -> (i32, i32) {
    %c0_i32 = arith.constant 0 : i32
    %c0_i32_0 = arith.constant 0 : i32
    %c0_i32_1 = arith.constant 0 : i32
    return %c0_i32, %c0_i32_0 : i32, i32
  }
  func.func @transform_4(%arg0: i32) -> (i32, i32) {
    %c0_i32 = arith.constant 0 : i32
    %c0_i32_0 = arith.constant 0 : i32
    %c0_i32_1 = arith.constant 0 : i32
    return %c0_i32, %c0_i32_0 : i32, i32
  }
  func.func @transform_5(%arg0: i32) -> (i32, i32) {
    %c0_i32 = arith.constant 0 : i32
    %c0_i32_0 = arith.constant 0 : i32
    %c0_i32_1 = arith.constant 0 : i32
    return %c0_i32, %c0_i32_0 : i32, i32
  }
  func.func @transform_6(%arg0: i32) -> (i32, i32) {
    %c0_i32 = arith.constant 0 : i32
    %c0_i32_0 = arith.constant 0 : i32
    %c0_i32_1 = arith.constant 0 : i32
    return %c0_i32, %c0_i32_0 : i32, i32
  }
  func.func @transform_7(%arg0: i32) -> (i32, i32) {
    %c0_i32 = arith.constant 0 : i32
    %c0_i32_0 = arith.constant 0 : i32
    %c0_i32_1 = arith.constant 0 : i32
    return %c0_i32, %c0_i32_0 : i32, i32
  }
  func.func @transform_8(%arg0: i32) -> (i32, i32) {
    %c0_i32 = arith.constant 0 : i32
    %c0_i32_0 = arith.constant 0 : i32
    %c0_i32_1 = arith.constant 0 : i32
    return %c0_i32, %c0_i32_0 : i32, i32
  }
  func.func @transform_9(%arg0: i32) -> (i32, i32) {
    %c0_i32 = arith.constant 0 : i32
    %c0_i32_0 = arith.constant 0 : i32
    %c0_i32_1 = arith.constant 0 : i32
    return %c0_i32, %c0_i32_0 : i32, i32
  }
  func.func @transform_10(%arg0: i32) -> (i32, i32) {
    %c0_i32 = arith.constant 0 : i32
    %c0_i32_0 = arith.constant 0 : i32
    %c0_i32_1 = arith.constant 0 : i32
    return %c0_i32, %c0_i32_0 : i32, i32
  }
  func.func @transform_11(%arg0: i32) -> (i32, i32) {
    %c0_i32 = arith.constant 0 : i32
    %c0_i32_0 = arith.constant 0 : i32
    %c0_i32_1 = arith.constant 0 : i32
    return %c0_i32, %c0_i32_0 : i32, i32
  }
  func.func @transform_12(%arg0: i32) -> (i32, i32) {
    %c0_i32 = arith.constant 0 : i32
    %c0_i32_0 = arith.constant 0 : i32
    %c0_i32_1 = arith.constant 0 : i32
    return %c0_i32, %c0_i32_0 : i32, i32
  }
  func.func @transform_13(%arg0: i32) -> (i32, i32) {
    %c0_i32 = arith.constant 0 : i32
    %c0_i32_0 = arith.constant 0 : i32
    return %arg0, %c0_i32 : i32, i32
  }
}

</mosaic_0001>

<llo_original>
// kernel: tpu_custom_call.1
$region0: #{tpu_custom_call.1}
  #allocation0 [shape = 'u32[]', space=smem, size = 0x4, offset = 0x4, fixed_abs, tag = 'smem constant byte address 0x4 - core index']
  #allocation1 [shape = 'u32[144,128]{1,0:T(1,128)}', space=vmem, size = 0x12000, scoped, tag = 'internal scratch']
  %s0 = inlined_call_operand.hbm [shape: f32[8,32], index: 0, kind: input, shape index: {}]
  %s1 = inlined_call_operand.hbm [shape: f32[32,64], index: 1, kind: input, shape index: {}]
  %s2 = inlined_call_operand.vmem [shape: f32[1,64], index: 2, kind: input, shape index: {}]
  %s3 = inlined_call_operand.vmem [shape: f32[64,64], index: 3, kind: input, shape index: {}]
  %s4 = inlined_call_operand.vmem [shape: f32[1,64], index: 4, kind: input, shape index: {}]
  %s5 = inlined_call_operand.vmem [shape: f32[64,32], index: 5, kind: input, shape index: {}]
  %s6 = inlined_call_operand.hbm [shape: f32[1,32], index: 6, kind: input, shape index: {}]
  %s7 = inlined_call_operand.hbm [shape: f32[64,128], index: 7, kind: input, shape index: {}]
  %s8 = inlined_call_operand.hbm [shape: f32[1,128], index: 8, kind: input, shape index: {}]
  %s9 = inlined_call_operand.hbm [shape: f32[32,64], index: 9, kind: input, shape index: {}]
  %s10 = inlined_call_operand.vmem [shape: f32[1,64], index: 10, kind: input, shape index: {}]
  %s11 = inlined_call_operand.vmem [shape: f32[64,128], index: 11, kind: input, shape index: {}]
  %s12 = inlined_call_operand.vmem [shape: f32[1,128], index: 12, kind: input, shape index: {}]
  %s13 = inlined_call_operand.hbm [shape: f32[8,128], index: 13, kind: output, shape index: {}]
  %s14 = sld [smem:[#allocation0]]
  $region86: #{tpu_custom_call.1} parent=0
    _
  %s16 = ssub.s32 1, %s14
  %s17 = scalar_select 0, %s16, %s14
  $region1: #{tpu_custom_call.1} parent=0
    #allocation2 [shape = 'u8[4096]{0}', space=vmem, size = 0x1000, scoped, tag = 'input window, operand 0, single buffered']
    #allocation3 [shape = 's32[1]{0}', space=sflag, size = 0x4, scoped, tag = 'scoped memory for tpu_custom_call.1']
    #allocation4 [shape = 's32[1]{0}', space=sflag, size = 0x4, scoped, tag = 'scoped memory for tpu_custom_call.1']
    #allocation5 [shape = 'u8[16384]{0}', space=vmem, size = 0x4000, scoped, tag = 'input window, operand 1, single buffered']
    #allocation6 [shape = 's32[1]{0}', space=sflag, size = 0x4, scoped, tag = 'scoped memory for tpu_custom_call.1']
    #allocation7 [shape = 'u8[512]{0}', space=vmem, size = 0x400, scoped, tag = 'input window, operand 6, single buffered']
    #allocation8 [shape = 'u8[32768]{0}', space=vmem, size = 0x8000, scoped, tag = 'input window, operand 7, single buffered']
    #allocation9 [shape = 's32[1]{0}', space=sflag, size = 0x4, scoped, tag = 'scoped memory for tpu_custom_call.1']
    #allocation10 [shape = 'u8[512]{0}', space=vmem, size = 0x400, scoped, tag = 'input window, operand 8, single buffered']
    #allocation11 [shape = 'u8[16384]{0}', space=vmem, size = 0x4000, scoped, tag = 'input window, operand 9, single buffered']
    #allocation12 [shape = 's32[1]{0}', space=sflag, size = 0x4, scoped, tag = 'scoped memory for tpu_custom_call.1']
    #allocation13 [shape = 'u8[4096]{0}', space=vmem, size = 0x1000, scoped, tag = 'output window, operand 0, single buffered']
    %18 = vsyncpa [#allocation3], 0
    %19 = vsyncpa [#allocation6], 0
    %20 = vsyncpa [#allocation9], 0
    %21 = vsyncpa [#allocation12], 0
    %22 = vsyncpa [#allocation4], 0
    // Predicated region
    $region2: #{tpu_custom_call.1} parent=1 // pred_check
      _
    $region3: #{tpu_custom_call.1} parent=1 // pred_check_branch
      %24 = sbr.rel (0) target = $region5
    $region4: #{tpu_custom_call.1} parent=1 // pred_region
      %s26 = ssub.s32 128, 128
      %27 = vsyncadd [#allocation3], %s26
      %s29 = sshll.u32 [#allocation2], 4
      %s30 = int_to_ptr.vmem [resolvable:$true] %s29
      %32 = dma.hbm_to_vmem [thread:$0]  %s0, 128, %s30, [#allocation3]
    $region5: #{tpu_custom_call.1} parent=1 // pred_fallthru
      _
    // Predicated region
    $region6: #{tpu_custom_call.1} parent=1 // pred_check
      _
    $region7: #{tpu_custom_call.1} parent=1 // pred_check_branch
      %34 = sbr.rel (0) target = $region9
    $region8: #{tpu_custom_call.1} parent=1 // pred_region
      %s36 = ssub.s32 512, 512
      %37 = vsyncadd [#allocation6], %s36
      %s38 = sshll.u32 [#allocation5], 4
      %s39 = int_to_ptr.vmem [resolvable:$true] %s38
      %44 = dma.hbm_to_vmem [thread:$0]  %s1, 512, %s39, [#allocation6], 128, 128, 8
    $region9: #{tpu_custom_call.1} parent=1 // pred_fallthru
      _
    // Predicated region
    $region10: #{tpu_custom_call.1} parent=1 // pred_check
      _
    $region11: #{tpu_custom_call.1} parent=1 // pred_check_branch
      %46 = sbr.rel (0) target = $region13
    $region12: #{tpu_custom_call.1} parent=1 // pred_region
      _
    $region13: #{tpu_custom_call.1} parent=1 // pred_fallthru
      _
    // Predicated region
    $region14: #{tpu_custom_call.1} parent=1 // pred_check
      _
    $region15: #{tpu_custom_call.1} parent=1 // pred_check_branch
      %48 = sbr.rel (0) target = $region17
    $region16: #{tpu_custom_call.1} parent=1 // pred_region
      _
    $region17: #{tpu_custom_call.1} parent=1 // pred_fallthru
      _
    // Predicated region
    $region18: #{tpu_custom_call.1} parent=1 // pred_check
      _
    $region19: #{tpu_custom_call.1} parent=1 // pred_check_branch
      %50 = sbr.rel (0) target = $region21
    $region20: #{tpu_custom_call.1} parent=1 // pred_region
      _
    $region21: #{tpu_custom_call.1} parent=1 // pred_fallthru
      _
    // Predicated region
    $region22: #{tpu_custom_call.1} parent=1 // pred_check
      _
    $region23: #{tpu_custom_call.1} parent=1 // pred_check_branch
      %52 = sbr.rel (0) target = $region25
    $region24: #{tpu_custom_call.1} parent=1 // pred_region
      _
    $region25: #{tpu_custom_call.1} parent=1 // pred_fallthru
      _
    // Predicated region
    $region26: #{tpu_custom_call.1} parent=1 // pred_check
      _
    $region27: #{tpu_custom_call.1} parent=1 // pred_check_branch
      %54 = sbr.rel (0) target = $region29
    $region28: #{tpu_custom_call.1} parent=1 // pred_region
      %s56 = ssub.s32 16, 16
      %57 = vsyncadd [#allocation6], %s56
      %s59 = sshll.u32 [#allocation7], 4
      %s60 = int_to_ptr.vmem [resolvable:$true] %s59
      %62 = dma.hbm_to_vmem [thread:$0]  %s6, 16, %s60, [#allocation6]
    $region29: #{tpu_custom_call.1} parent=1 // pred_fallthru
      _
    // Predicated region
    $region30: #{tpu_custom_call.1} parent=1 // pred_check
      _
    $region31: #{tpu_custom_call.1} parent=1 // pred_check_branch
      %64 = sbr.rel (0) target = $region33
    $region32: #{tpu_custom_call.1} parent=1 // pred_region
      %s66 = ssub.s32 1024, 1024
      %67 = vsyncadd [#allocation9], %s66
      %s68 = sshll.u32 [#allocation8], 4
      %s69 = int_to_ptr.vmem [resolvable:$true] %s68
      %74 = dma.hbm_to_vmem [thread:$0]  %s7, 1024, %s69, [#allocation9], 128, 128, 8
    $region33: #{tpu_custom_call.1} parent=1 // pred_fallthru
      _
    // Predicated region
    $region34: #{tpu_custom_call.1} parent=1 // pred_check
      _
    $region35: #{tpu_custom_call.1} parent=1 // pred_check_branch
      %76 = sbr.rel (0) target = $region37
    $region36: #{tpu_custom_call.1} parent=1 // pred_region
      %s78 = ssub.s32 16, 16
      %79 = vsyncadd [#allocation9], %s78
      %s81 = sshll.u32 [#allocation10], 4
      %s82 = int_to_ptr.vmem [resolvable:$true] %s81
      %84 = dma.hbm_to_vmem [thread:$0]  %s8, 16, %s82, [#allocation9]
    $region37: #{tpu_custom_call.1} parent=1 // pred_fallthru
      _
    // Predicated region
    $region38: #{tpu_custom_call.1} parent=1 // pred_check
      _
    $region39: #{tpu_custom_call.1} parent=1 // pred_check_branch
      %86 = sbr.rel (0) target = $region41
    $region40: #{tpu_custom_call.1} parent=1 // pred_region
      %s88 = ssub.s32 512, 512
      %89 = vsyncadd [#allocation12], %s88
      %s90 = sshll.u32 [#allocation11], 4
      %s91 = int_to_ptr.vmem [resolvable:$true] %s90
      %96 = dma.hbm_to_vmem [thread:$0]  %s9, 512, %s91, [#allocation12], 128, 128, 8
    $region41: #{tpu_custom_call.1} parent=1 // pred_fallthru
      _
    // Predicated region
    $region42: #{tpu_custom_call.1} parent=1 // pred_check
      _
    $region43: #{tpu_custom_call.1} parent=1 // pred_check_branch
      %98 = sbr.rel (0) target = $region45
    $region44: #{tpu_custom_call.1} parent=1 // pred_region
      _
    $region45: #{tpu_custom_call.1} parent=1 // pred_fallthru
      _
    // Predicated region
    $region46: #{tpu_custom_call.1} parent=1 // pred_check
      _
    $region47: #{tpu_custom_call.1} parent=1 // pred_check_branch
      %100 = sbr.rel (0) target = $region49
    $region48: #{tpu_custom_call.1} parent=1 // pred_region
      _
    $region49: #{tpu_custom_call.1} parent=1 // pred_fallthru
      _
    // Predicated region
    $region50: #{tpu_custom_call.1} parent=1 // pred_check
      _
    $region51: #{tpu_custom_call.1} parent=1 // pred_check_branch
      %102 = sbr.rel (0) target = $region53
    $region52: #{tpu_custom_call.1} parent=1 // pred_region
      _
    $region53: #{tpu_custom_call.1} parent=1 // pred_fallthru
      _
    // Predicated region
    $region54: #{tpu_custom_call.1} parent=1 // pred_check
      _
    $region55: #{tpu_custom_call.1} parent=1 // pred_check_branch
      %104 = sbr.rel (0) target = $region57
    $region56: #{tpu_custom_call.1} parent=1 // pred_region
      %105 = dma.done [#allocation3], 128
    $region57: #{tpu_custom_call.1} parent=1 // pred_fallthru
      _
    // Predicated region
    $region58: #{tpu_custom_call.1} parent=1 // pred_check
      _
    $region59: #{tpu_custom_call.1} parent=1 // pred_check_branch
      %107 = sbr.rel (0) target = $region61
    $region60: #{tpu_custom_call.1} parent=1 // pred_region
      %108 = dma.done [#allocation6], 512
    $region61: #{tpu_custom_call.1} parent=1 // pred_fallthru
      _
    // Predicated region
    $region62: #{tpu_custom_call.1} parent=1 // pred_check
      _
    $region63: #{tpu_custom_call.1} parent=1 // pred_check_branch
      %110 = sbr.rel (0) target = $region65
    $region64: #{tpu_custom_call.1} parent=1 // pred_region
      %111 = dma.done [#allocation6], 16
    $region65: #{tpu_custom_call.1} parent=1 // pred_fallthru
      _
    // Predicated region
    $region66: #{tpu_custom_call.1} parent=1 // pred_check
      _
    $region67: #{tpu_custom_call.1} parent=1 // pred_check_branch
      %113 = sbr.rel (0) target = $region69
    $region68: #{tpu_custom_call.1} parent=1 // pred_region
      %114 = dma.done [#allocation9], 1024
    $region69: #{tpu_custom_call.1} parent=1 // pred_fallthru
      _
    // Predicated region
    $region70: #{tpu_custom_call.1} parent=1 // pred_check
      _
    $region71: #{tpu_custom_call.1} parent=1 // pred_check_branch
      %116 = sbr.rel (0) target = $region73
    $region72: #{tpu_custom_call.1} parent=1 // pred_region
      %117 = dma.done [#allocation9], 16
    $region73: #{tpu_custom_call.1} parent=1 // pred_fallthru
      _
    // Predicated region
    $region74: #{tpu_custom_call.1} parent=1 // pred_check
      _
    $region75: #{tpu_custom_call.1} parent=1 // pred_check_branch
      %119 = sbr.rel (0) target = $region77
    $region76: #{tpu_custom_call.1} parent=1 // pred_region
      %120 = dma.done [#allocation12], 512
    $region77: #{tpu_custom_call.1} parent=1 // pred_fallthru
      _
    %v121 = vld [vmem:[#allocation2] sm:$0xff]
    %v122 = vld [vmem:[#allocation5] sm:$0xff]
    %v123 = vld [vmem:[#allocation5 + $0x8] sm:$0xff]
    %v124 = vld [vmem:[#allocation5 + $0x10] sm:$0xff]
    %v125 = vld [vmem:[#allocation5 + $0x18] sm:$0xff]
    %v126 = vld [vmem:[%s2] sm:$0x1]
    %v128 = vlaneseq
    %v129 = vshrl.u32 %v128, 7
    %v130 = vsub.s32 0, %v129
    %v131 = vrot.slane %v126, %v130
    %vm133 = vcmask 261120
    %v135 = vsel %vm133, %v121, 0
    %137 = vmatprep.subr.mxu0 0.0
    %138 = vmatpush1.msra.mxu0 %v122
    %139 = vmatprep.subr.mxu0 0.0
    %140 = vmatpush1.msra.mxu0 %v123
    %141 = vmatprep.subr.mxu0 0.0
    %142 = vmatpush1.msra.mxu0 %v124
    %143 = vmatprep.subr.mxu0 0.0
    %144 = vmatpush1.msra.mxu0 %v125
    %145 = vmatprep.subr.mxu0 0.0
    %146 = vmatpush1.msra.mxu0 0.0
    %147 = vmatprep.subr.mxu0 0.0
    %148 = vmatpush1.msra.mxu0 0.0
    %149 = vmatprep.subr.mxu0 0.0
    %150 = vmatpush1.msra.mxu0 0.0
    %151 = vmatprep.subr.mxu0 0.0
    %152 = vmatpush1.msra.mxu0 0.0
    %153 = vmatprep.subr.mxu0 0.0
    %154 = vmatpush1.msra.mxu0 0.0
    %155 = vmatprep.subr.mxu0 0.0
    %156 = vmatpush1.msra.mxu0 0.0
    %157 = vmatprep.subr.mxu0 0.0
    %158 = vmatpush1.msra.mxu0 0.0
    %159 = vmatprep.subr.mxu0 0.0
    %160 = vmatpush1.msra.mxu0 0.0
    %161 = vmatprep.subr.mxu0 0.0
    %162 = vmatpush1.msra.mxu0 0.0
    %163 = vmatprep.subr.mxu0 0.0
    %164 = vmatpush1.msra.mxu0 0.0
    %165 = vmatprep.subr.mxu0 0.0
    %166 = vmatpush1.msra.mxu0 0.0
    %167 = vmatprep.subr.mxu0 0.0
    %168 = vmatpush1.msra.mxu0 0.0
    %169 = vmatprep.subr.mxu0 0.0
    %170 = vmatpush1.msra.mxu0 0.0
    %171 = vmatprep.subr.mxu0 0.0
    %172 = vmatpush1.msra.mxu0 0.0
    %173 = vmatprep.subr.mxu0 0.0
    %174 = vmatpush1.msra.mxu0 0.0
    %175 = vmatprep.subr.mxu0 0.0
    %176 = vmatpush1.msra.mxu0 0.0
    %177 = vmatprep.subr.mxu0 0.0
    %178 = vmatpush1.msra.mxu0 0.0
    %179 = vmatprep.subr.mxu0 0.0
    %180 = vmatpush1.msra.mxu0 0.0
    %181 = vmatprep.subr.mxu0 0.0
    %182 = vmatpush1.msra.mxu0 0.0
    %183 = vmatprep.subr.mxu0 0.0
    %184 = vmatpush1.msra.mxu0 0.0
    %185 = vmatprep.subr.mxu0 0.0
    %186 = vmatpush1.msra.mxu0 0.0
    %187 = vmatprep.subr.mxu0 0.0
    %188 = vmatpush1.msra.mxu0 0.0
    %189 = vmatprep.subr.mxu0 0.0
    %190 = vmatpush1.msra.mxu0 0.0
    %191 = vmatprep.subr.mxu0 0.0
    %192 = vmatpush1.msra.mxu0 0.0
    %193 = vmatprep.subr.mxu0 0.0
    %194 = vmatpush1.msra.mxu0 0.0
    %195 = vmatprep.subr.mxu0 0.0
    %196 = vmatpush1.msra.mxu0 0.0
    %197 = vmatprep.subr.mxu0 0.0
    %198 = vmatpush1.msra.mxu0 0.0
    %199 = vmatprep.subr.mxu0 0.0
    %200 = vmatpush1.msra.mxu0 0.0
    %201 = vmatprep.mubr.f32.mxu0 0.0
    %202 = vmatmul.mubr.f32.gmra.mrb[0].mxu0 %v135
    %v203 = vpop.f32.mrb[0].mxu0
    %v204 = vadd.f32 %v131, %v203
    %v205 = vpop.f32.mrb[0].mxu0
    %206 = vdwg.mxu0
    %v207 = vmax.f32 %v204, 0.0
    %v208 = vld [vmem:[%s3] sm:$0xff]
    %v209 = vld [vmem:[%s3 + $0x8] sm:$0xff]
    %v210 = vld [vmem:[%s3 + $0x10] sm:$0xff]
    %v211 = vld [vmem:[%s3 + $0x18] sm:$0xff]
    %v212 = vld [vmem:[%s3 + $0x20] sm:$0xff]
    %v213 = vld [vmem:[%s3 + $0x28] sm:$0xff]
    %v214 = vld [vmem:[%s3 + $0x30] sm:$0xff]
    %v215 = vld [vmem:[%s3 + $0x38] sm:$0xff]
    %v216 = vld [vmem:[%s4] sm:$0x1]
    %v218 = vlaneseq
    %v219 = vshrl.u32 %v218, 7
    %v220 = vsub.s32 0, %v219
    %v221 = vrot.slane %v216, %v220
    %vm223 = vcmask 523264
    %v225 = vsel %vm223, %v207, 0
    %227 = vmatprep.subr.mxu0 0.0
    %228 = vmatpush1.msra.mxu0 %v208
    %229 = vmatprep.subr.mxu0 0.0
    %230 = vmatpush1.msra.mxu0 %v209
    %231 = vmatprep.subr.mxu0 0.0
    %232 = vmatpush1.msra.mxu0 %v210
    %233 = vmatprep.subr.mxu0 0.0
    %234 = vmatpush1.msra.mxu0 %v211
    %235 = vmatprep.subr.mxu0 0.0
    %236 = vmatpush1.msra.mxu0 %v212
    %237 = vmatprep.subr.mxu0 0.0
    %238 = vmatpush1.msra.mxu0 %v213
    %239 = vmatprep.subr.mxu0 0.0
    %240 = vmatpush1.msra.mxu0 %v214
    %241 = vmatprep.subr.mxu0 0.0
    %242 = vmatpush1.msra.mxu0 %v215
    %243 = vmatprep.subr.mxu0 0.0
    %244 = vmatpush1.msra.mxu0 0.0
    %245 = vmatprep.subr.mxu0 0.0
    %246 = vmatpush1.msra.mxu0 0.0
    %247 = vmatprep.subr.mxu0 0.0
    %248 = vmatpush1.msra.mxu0 0.0
    %249 = vmatprep.subr.mxu0 0.0
    %250 = vmatpush1.msra.mxu0 0.0
    %251 = vmatprep.subr.mxu0 0.0
    %252 = vmatpush1.msra.mxu0 0.0
    %253 = vmatprep.subr.mxu0 0.0
    %254 = vmatpush1.msra.mxu0 0.0
    %255 = vmatprep.subr.mxu0 0.0
    %256 = vmatpush1.msra.mxu0 0.0
    %257 = vmatprep.subr.mxu0 0.0
    %258 = vmatpush1.msra.mxu0 0.0
    %259 = vmatprep.subr.mxu0 0.0
    %260 = vmatpush1.msra.mxu0 0.0
    %261 = vmatprep.subr.mxu0 0.0
    %262 = vmatpush1.msra.mxu0 0.0
    %263 = vmatprep.subr.mxu0 0.0
    %264 = vmatpush1.msra.mxu0 0.0
    %265 = vmatprep.subr.mxu0 0.0
    %266 = vmatpush1.msra.mxu0 0.0
    %267 = vmatprep.subr.mxu0 0.0
    %268 = vmatpush1.msra.mxu0 0.0
    %269 = vmatprep.subr.mxu0 0.0
    %270 = vmatpush1.msra.mxu0 0.0
    %271 = vmatprep.subr.mxu0 0.0
    %272 = vmatpush1.msra.mxu0 0.0
    %273 = vmatprep.subr.mxu0 0.0
    %274 = vmatpush1.msra.mxu0 0.0
    %275 = vmatprep.subr.mxu0 0.0
    %276 = vmatpush1.msra.mxu0 0.0
    %277 = vmatprep.subr.mxu0 0.0
    %278 = vmatpush1.msra.mxu0 0.0
    %279 = vmatprep.subr.mxu0 0.0
    %280 = vmatpush1.msra.mxu0 0.0
    %281 = vmatprep.subr.mxu0 0.0
    %282 = vmatpush1.msra.mxu0 0.0
    %283 = vmatprep.subr.mxu0 0.0
    %284 = vmatpush1.msra.mxu0 0.0
    %285 = vmatprep.subr.mxu0 0.0
    %286 = vmatpush1.msra.mxu0 0.0
    %287 = vmatprep.subr.mxu0 0.0
    %288 = vmatpush1.msra.mxu0 0.0
    %289 = vmatprep.subr.mxu0 0.0
    %290 = vmatpush1.msra.mxu0 0.0
    %291 = vmatprep.mubr.f32.mxu0 0.0
    %292 = vmatmul.mubr.f32.gmra.mrb[0].mxu0 %v225
    %v293 = vpop.f32.mrb[0].mxu0
    %v294 = vadd.f32 %v221, %v293
    %v295 = vpop.f32.mrb[0].mxu0
    %296 = vdwg.mxu0
    %v297 = vmax.f32 %v294, 0.0
    %v298 = vld [vmem:[%s5] sm:$0xff]
    %v299 = vld [vmem:[%s5 + $0x8] sm:$0xff]
    %v300 = vld [vmem:[%s5 + $0x10] sm:$0xff]
    %v301 = vld [vmem:[%s5 + $0x18] sm:$0xff]
    %v302 = vld [vmem:[%s5 + $0x20] sm:$0xff]
    %v303 = vld [vmem:[%s5 + $0x28] sm:$0xff]
    %v304 = vld [vmem:[%s5 + $0x30] sm:$0xff]
    %v305 = vld [vmem:[%s5 + $0x38] sm:$0xff]
    %v306 = vld [vmem:[#allocation7] sm:$0x1]
    %v308 = vlaneseq
    %v309 = vshrl.u32 %v308, 7
    %v310 = vsub.s32 0, %v309
    %v311 = vrot.slane %v306, %v310
    %v314 = vsel %vm223, %v297, 0
    %316 = vmatprep.subr.mxu0 0.0
    %317 = vmatpush1.msra.mxu0 %v298
    %318 = vmatprep.subr.mxu0 0.0
    %319 = vmatpush1.msra.mxu0 %v299
    %320 = vmatprep.subr.mxu0 0.0
    %321 = vmatpush1.msra.mxu0 %v300
    %322 = vmatprep.subr.mxu0 0.0
    %323 = vmatpush1.msra.mxu0 %v301
    %324 = vmatprep.subr.mxu0 0.0
    %325 = vmatpush1.msra.mxu0 %v302
    %326 = vmatprep.subr.mxu0 0.0
    %327 = vmatpush1.msra.mxu0 %v303
    %328 = vmatprep.subr.mxu0 0.0
    %329 = vmatpush1.msra.mxu0 %v304
    %330 = vmatprep.subr.mxu0 0.0
    %331 = vmatpush1.msra.mxu0 %v305
    %332 = vmatprep.subr.mxu0 0.0
    %333 = vmatpush1.msra.mxu0 0.0
    %334 = vmatprep.subr.mxu0 0.0
    %335 = vmatpush1.msra.mxu0 0.0
    %336 = vmatprep.subr.mxu0 0.0
    %337 = vmatpush1.msra.mxu0 0.0
    %338 = vmatprep.subr.mxu0 0.0
    %339 = vmatpush1.msra.mxu0 0.0
    %340 = vmatprep.subr.mxu0 0.0
    %341 = vmatpush1.msra.mxu0 0.0
    %342 = vmatprep.subr.mxu0 0.0
    %343 = vmatpush1.msra.mxu0 0.0
    %344 = vmatprep.subr.mxu0 0.0
    %345 = vmatpush1.msra.mxu0 0.0
    %346 = vmatprep.subr.mxu0 0.0
    %347 = vmatpush1.msra.mxu0 0.0
    %348 = vmatprep.subr.mxu0 0.0
    %349 = vmatpush1.msra.mxu0 0.0
    %350 = vmatprep.subr.mxu0 0.0
    %351 = vmatpush1.msra.mxu0 0.0
    %352 = vmatprep.subr.mxu0 0.0
    %353 = vmatpush1.msra.mxu0 0.0
    %354 = vmatprep.subr.mxu0 0.0
    %355 = vmatpush1.msra.mxu0 0.0
    %356 = vmatprep.subr.mxu0 0.0
    %357 = vmatpush1.msra.mxu0 0.0
    %358 = vmatprep.subr.mxu0 0.0
    %359 = vmatpush1.msra.mxu0 0.0
    %360 = vmatprep.subr.mxu0 0.0
    %361 = vmatpush1.msra.mxu0 0.0
    %362 = vmatprep.subr.mxu0 0.0
    %363 = vmatpush1.msra.mxu0 0.0
    %364 = vmatprep.subr.mxu0 0.0
    %365 = vmatpush1.msra.mxu0 0.0
    %366 = vmatprep.subr.mxu0 0.0
    %367 = vmatpush1.msra.mxu0 0.0
    %368 = vmatprep.subr.mxu0 0.0
    %369 = vmatpush1.msra.mxu0 0.0
    %370 = vmatprep.subr.mxu0 0.0
    %371 = vmatpush1.msra.mxu0 0.0
    %372 = vmatprep.subr.mxu0 0.0
    %373 = vmatpush1.msra.mxu0 0.0
    %374 = vmatprep.subr.mxu0 0.0
    %375 = vmatpush1.msra.mxu0 0.0
    %376 = vmatprep.subr.mxu0 0.0
    %377 = vmatpush1.msra.mxu0 0.0
    %378 = vmatprep.subr.mxu0 0.0
    %379 = vmatpush1.msra.mxu0 0.0
    %380 = vmatprep.mubr.f32.mxu0 0.0
    %381 = vmatmul.mubr.f32.gmra.mrb[0].mxu0 %v314
    %v382 = vpop.f32.mrb[0].mxu0
    %v383 = vadd.f32 %v311, %v382
    %v384 = vpop.f32.mrb[0].mxu0
    %385 = vdwg.mxu0
    %v386 = vmax.f32 %v383, 0.0
    %v387 = vld [vmem:[#allocation8] sm:$0xff]
    %v388 = vld [vmem:[#allocation8 + $0x8] sm:$0xff]
    %v389 = vld [vmem:[#allocation8 + $0x10] sm:$0xff]
    %v390 = vld [vmem:[#allocation8 + $0x18] sm:$0xff]
    %v391 = vld [vmem:[#allocation8 + $0x20] sm:$0xff]
    %v392 = vld [vmem:[#allocation8 + $0x28] sm:$0xff]
    %v393 = vld [vmem:[#allocation8 + $0x30] sm:$0xff]
    %v394 = vld [vmem:[#allocation8 + $0x38] sm:$0xff]
    %v395 = vld [vmem:[#allocation10] sm:$0x1]
    %v397 = vlaneseq
    %v398 = vshrl.u32 %v397, 7
    %v399 = vsub.s32 0, %v398
    %v400 = vrot.slane %v395, %v399
    %402 = vmatprep.subr.mxu0 0.0
    %403 = vmatpush1.msra.mxu0 %v387
    %404 = vmatprep.subr.mxu0 0.0
    %405 = vmatpush1.msra.mxu0 %v388
    %406 = vmatprep.subr.mxu0 0.0
    %407 = vmatpush1.msra.mxu0 %v389
    %408 = vmatprep.subr.mxu0 0.0
    %409 = vmatpush1.msra.mxu0 %v390
    %410 = vmatprep.subr.mxu0 0.0
    %411 = vmatpush1.msra.mxu0 %v391
    %412 = vmatprep.subr.mxu0 0.0
    %413 = vmatpush1.msra.mxu0 %v392
    %414 = vmatprep.subr.mxu0 0.0
    %415 = vmatpush1.msra.mxu0 %v393
    %416 = vmatprep.subr.mxu0 0.0
    %417 = vmatpush1.msra.mxu0 %v394
    %418 = vmatprep.subr.mxu0 0.0
    %419 = vmatpush1.msra.mxu0 0.0
    %420 = vmatprep.subr.mxu0 0.0
    %421 = vmatpush1.msra.mxu0 0.0
    %422 = vmatprep.subr.mxu0 0.0
    %423 = vmatpush1.msra.mxu0 0.0
    %424 = vmatprep.subr.mxu0 0.0
    %425 = vmatpush1.msra.mxu0 0.0
    %426 = vmatprep.subr.mxu0 0.0
    %427 = vmatpush1.msra.mxu0 0.0
    %428 = vmatprep.subr.mxu0 0.0
    %429 = vmatpush1.msra.mxu0 0.0
    %430 = vmatprep.subr.mxu0 0.0
    %431 = vmatpush1.msra.mxu0 0.0
    %432 = vmatprep.subr.mxu0 0.0
    %433 = vmatpush1.msra.mxu0 0.0
    %434 = vmatprep.subr.mxu0 0.0
    %435 = vmatpush1.msra.mxu0 0.0
    %436 = vmatprep.subr.mxu0 0.0
    %437 = vmatpush1.msra.mxu0 0.0
    %438 = vmatprep.subr.mxu0 0.0
    %439 = vmatpush1.msra.mxu0 0.0
    %440 = vmatprep.subr.mxu0 0.0
    %441 = vmatpush1.msra.mxu0 0.0
    %442 = vmatprep.subr.mxu0 0.0
    %443 = vmatpush1.msra.mxu0 0.0
    %444 = vmatprep.subr.mxu0 0.0
    %445 = vmatpush1.msra.mxu0 0.0
    %446 = vmatprep.subr.mxu0 0.0
    %447 = vmatpush1.msra.mxu0 0.0
    %448 = vmatprep.subr.mxu0 0.0
    %449 = vmatpush1.msra.mxu0 0.0
    %450 = vmatprep.subr.mxu0 0.0
    %451 = vmatpush1.msra.mxu0 0.0
    %452 = vmatprep.subr.mxu0 0.0
    %453 = vmatpush1.msra.mxu0 0.0
    %454 = vmatprep.subr.mxu0 0.0
    %455 = vmatpush1.msra.mxu0 0.0
    %456 = vmatprep.subr.mxu0 0.0
    %457 = vmatpush1.msra.mxu0 0.0
    %458 = vmatprep.subr.mxu0 0.0
    %459 = vmatpush1.msra.mxu0 0.0
    %460 = vmatprep.subr.mxu0 0.0
    %461 = vmatpush1.msra.mxu0 0.0
    %462 = vmatprep.subr.mxu0 0.0
    %463 = vmatpush1.msra.mxu0 0.0
    %464 = vmatprep.subr.mxu0 0.0
    %465 = vmatpush1.msra.mxu0 0.0
    %466 = vmatprep.mubr.f32.mxu0 0.0
    %467 = vmatmul.mubr.f32.gmra.mrb[0].mxu0 %v314
    %v468 = vpop.f32.mrb[0].mxu0
    %v469 = vadd.f32 %v400, %v468
    %v470 = vpop.f32.mrb[0].mxu0
    %471 = vdwg.mxu0
    %472 = vmax.xlane.f32.xlu0 %v469
    %v473 = vpop.xlane.xlu0 %472
    %v474 = vsub.f32 %v469, %v473
    %v475 = vmul.f32 %v474, 1.442695
    %v476 = vpow.pop %v475
    %477 = vadd.xlane.f32.xlu0 %v476
    %v478 = vpop.xlane.xlu0 %477
    %v479 = vlog2.pop %v478
    %v480 = vmul.f32 %v479, 0.6931472
    %v481 = vsub.f32 %v474, %v480
    %v482 = vld [vmem:[#allocation11] sm:$0xff]
    %v483 = vld [vmem:[#allocation11 + $0x8] sm:$0xff]
    %v484 = vld [vmem:[#allocation11 + $0x10] sm:$0xff]
    %v485 = vld [vmem:[#allocation11 + $0x18] sm:$0xff]
    %v486 = vld [vmem:[%s10] sm:$0x1]
    %v488 = vlaneseq
    %v489 = vshrl.u32 %v488, 7
    %v490 = vsub.s32 0, %v489
    %v491 = vrot.slane %v486, %v490
    %v494 = vsel %vm133, %v386, 0
    %496 = vmatprep.subr.mxu0 0.0
    %497 = vmatpush1.msra.mxu0 %v482
    %498 = vmatprep.subr.mxu0 0.0
    %499 = vmatpush1.msra.mxu0 %v483
    %500 = vmatprep.subr.mxu0 0.0
    %501 = vmatpush1.msra.mxu0 %v484
    %502 = vmatprep.subr.mxu0 0.0
    %503 = vmatpush1.msra.mxu0 %v485
    %504 = vmatprep.subr.mxu0 0.0
    %505 = vmatpush1.msra.mxu0 0.0
    %506 = vmatprep.subr.mxu0 0.0
    %507 = vmatpush1.msra.mxu0 0.0
    %508 = vmatprep.subr.mxu0 0.0
    %509 = vmatpush1.msra.mxu0 0.0
    %510 = vmatprep.subr.mxu0 0.0
    %511 = vmatpush1.msra.mxu0 0.0
    %512 = vmatprep.subr.mxu0 0.0
    %513 = vmatpush1.msra.mxu0 0.0
    %514 = vmatprep.subr.mxu0 0.0
    %515 = vmatpush1.msra.mxu0 0.0
    %516 = vmatprep.subr.mxu0 0.0
    %517 = vmatpush1.msra.mxu0 0.0
    %518 = vmatprep.subr.mxu0 0.0
    %519 = vmatpush1.msra.mxu0 0.0
    %520 = vmatprep.subr.mxu0 0.0
    %521 = vmatpush1.msra.mxu0 0.0
    %522 = vmatprep.subr.mxu0 0.0
    %523 = vmatpush1.msra.mxu0 0.0
    %524 = vmatprep.subr.mxu0 0.0
    %525 = vmatpush1.msra.mxu0 0.0
    %526 = vmatprep.subr.mxu0 0.0
    %527 = vmatpush1.msra.mxu0 0.0
    %528 = vmatprep.subr.mxu0 0.0
    %529 = vmatpush1.msra.mxu0 0.0
    %530 = vmatprep.subr.mxu0 0.0
    %531 = vmatpush1.msra.mxu0 0.0
    %532 = vmatprep.subr.mxu0 0.0
    %533 = vmatpush1.msra.mxu0 0.0
    %534 = vmatprep.subr.mxu0 0.0
    %535 = vmatpush1.msra.mxu0 0.0
    %536 = vmatprep.subr.mxu0 0.0
    %537 = vmatpush1.msra.mxu0 0.0
    %538 = vmatprep.subr.mxu0 0.0
    %539 = vmatpush1.msra.mxu0 0.0
    %540 = vmatprep.subr.mxu0 0.0
    %541 = vmatpush1.msra.mxu0 0.0
    %542 = vmatprep.subr.mxu0 0.0
    %543 = vmatpush1.msra.mxu0 0.0
    %544 = vmatprep.subr.mxu0 0.0
    %545 = vmatpush1.msra.mxu0 0.0
    %546 = vmatprep.subr.mxu0 0.0
    %547 = vmatpush1.msra.mxu0 0.0
    %548 = vmatprep.subr.mxu0 0.0
    %549 = vmatpush1.msra.mxu0 0.0
    %550 = vmatprep.subr.mxu0 0.0
    %551 = vmatpush1.msra.mxu0 0.0
    %552 = vmatprep.subr.mxu0 0.0
    %553 = vmatpush1.msra.mxu0 0.0
    %554 = vmatprep.subr.mxu0 0.0
    %555 = vmatpush1.msra.mxu0 0.0
    %556 = vmatprep.subr.mxu0 0.0
    %557 = vmatpush1.msra.mxu0 0.0
    %558 = vmatprep.subr.mxu0 0.0
    %559 = vmatpush1.msra.mxu0 0.0
    %560 = vmatprep.mubr.f32.mxu0 0.0
    %561 = vmatmul.mubr.f32.gmra.mrb[0].mxu0 %v494
    %v562 = vpop.f32.mrb[0].mxu0
    %v563 = vadd.f32 %v491, %v562
    %v564 = vpop.f32.mrb[0].mxu0
    %565 = vdwg.mxu0
    %v566 = vmax.f32 %v563, 0.0
    %v567 = vld [vmem:[%s11] sm:$0xff]
    %v568 = vld [vmem:[%s11 + $0x8] sm:$0xff]
    %v569 = vld [vmem:[%s11 + $0x10] sm:$0xff]
    %v570 = vld [vmem:[%s11 + $0x18] sm:$0xff]
    %v571 = vld [vmem:[%s11 + $0x20] sm:$0xff]
    %v572 = vld [vmem:[%s11 + $0x28] sm:$0xff]
    %v573 = vld [vmem:[%s11 + $0x30] sm:$0xff]
    %v574 = vld [vmem:[%s11 + $0x38] sm:$0xff]
    %v575 = vld [vmem:[%s12] sm:$0x1]
    %v577 = vlaneseq
    %v578 = vshrl.u32 %v577, 7
    %v579 = vsub.s32 0, %v578
    %v580 = vrot.slane %v575, %v579
    %v583 = vsel %vm223, %v566, 0
    %585 = vmatprep.subr.mxu0 0.0
    %586 = vmatpush1.msra.mxu0 %v567
    %587 = vmatprep.subr.mxu0 0.0
    %588 = vmatpush1.msra.mxu0 %v568
    %589 = vmatprep.subr.mxu0 0.0
    %590 = vmatpush1.msra.mxu0 %v569
    %591 = vmatprep.subr.mxu0 0.0
    %592 = vmatpush1.msra.mxu0 %v570
    %593 = vmatprep.subr.mxu0 0.0
    %594 = vmatpush1.msra.mxu0 %v571
    %595 = vmatprep.subr.mxu0 0.0
    %596 = vmatpush1.msra.mxu0 %v572
    %597 = vmatprep.subr.mxu0 0.0
    %598 = vmatpush1.msra.mxu0 %v573
    %599 = vmatprep.subr.mxu0 0.0
    %600 = vmatpush1.msra.mxu0 %v574
    %601 = vmatprep.subr.mxu0 0.0
    %602 = vmatpush1.msra.mxu0 0.0
    %603 = vmatprep.subr.mxu0 0.0
    %604 = vmatpush1.msra.mxu0 0.0
    %605 = vmatprep.subr.mxu0 0.0
    %606 = vmatpush1.msra.mxu0 0.0
    %607 = vmatprep.subr.mxu0 0.0
    %608 = vmatpush1.msra.mxu0 0.0
    %609 = vmatprep.subr.mxu0 0.0
    %610 = vmatpush1.msra.mxu0 0.0
    %611 = vmatprep.subr.mxu0 0.0
    %612 = vmatpush1.msra.mxu0 0.0
    %613 = vmatprep.subr.mxu0 0.0
    %614 = vmatpush1.msra.mxu0 0.0
    %615 = vmatprep.subr.mxu0 0.0
    %616 = vmatpush1.msra.mxu0 0.0
    %617 = vmatprep.subr.mxu0 0.0
    %618 = vmatpush1.msra.mxu0 0.0
    %619 = vmatprep.subr.mxu0 0.0
    %620 = vmatpush1.msra.mxu0 0.0
    %621 = vmatprep.subr.mxu0 0.0
    %622 = vmatpush1.msra.mxu0 0.0
    %623 = vmatprep.subr.mxu0 0.0
    %624 = vmatpush1.msra.mxu0 0.0
    %625 = vmatprep.subr.mxu0 0.0
    %626 = vmatpush1.msra.mxu0 0.0
    %627 = vmatprep.subr.mxu0 0.0
    %628 = vmatpush1.msra.mxu0 0.0
    %629 = vmatprep.subr.mxu0 0.0
    %630 = vmatpush1.msra.mxu0 0.0
    %631 = vmatprep.subr.mxu0 0.0
    %632 = vmatpush1.msra.mxu0 0.0
    %633 = vmatprep.subr.mxu0 0.0
    %634 = vmatpush1.msra.mxu0 0.0
    %635 = vmatprep.subr.mxu0 0.0
    %636 = vmatpush1.msra.mxu0 0.0
    %637 = vmatprep.subr.mxu0 0.0
    %638 = vmatpush1.msra.mxu0 0.0
    %639 = vmatprep.subr.mxu0 0.0
    %640 = vmatpush1.msra.mxu0 0.0
    %641 = vmatprep.subr.mxu0 0.0
    %642 = vmatpush1.msra.mxu0 0.0
    %643 = vmatprep.subr.mxu0 0.0
    %644 = vmatpush1.msra.mxu0 0.0
    %645 = vmatprep.subr.mxu0 0.0
    %646 = vmatpush1.msra.mxu0 0.0
    %647 = vmatprep.subr.mxu0 0.0
    %648 = vmatpush1.msra.mxu0 0.0
    %649 = vmatprep.mubr.f32.mxu0 0.0
    %650 = vmatmul.mubr.f32.gmra.mrb[0].mxu0 %v583
    %v651 = vpop.f32.mrb[0].mxu0
    %v652 = vadd.f32 %v580, %v651
    %v653 = vpop.f32.mrb[0].mxu0
    %654 = vdwg.mxu0
    %v655 = vlaneseq
    %v656 = vand.u32 %v655, 127
    %vm657 = vcmp.lt.s32.totalorder %v656, 4
    %vm658 = vcmp.ge.s32.totalorder %v656, 36
    %vm659 = vcmp.lt.s32.totalorder %v656, 68
    %vm660 = vmand %vm658, %vm659
    %v661 = vadd.f32 %v652, 1e-06
    %v662 = vmul.f32 %v661, 1.442695
    %v663 = vpow.pop %v662
    %v664 = vsel %vm660, %v663, %v652
    %v665 = vsel %vm657, %v481, %v664
    %666 = vst [vmem:[#allocation13] sm:$0xff] %v665
    // Predicated region
    $region78: #{tpu_custom_call.1} parent=1 // pred_check
      _
    $region79: #{tpu_custom_call.1} parent=1 // pred_check_branch
      %668 = sbr.rel (0) target = $region81
    $region80: #{tpu_custom_call.1} parent=1 // pred_region
      %s670 = ssub.s32 128, 128
      %671 = vsyncadd [#allocation4], %s670
      %s673 = sshll.u32 [#allocation13], 4
      %s674 = int_to_ptr.vmem [resolvable:$true] %s673
      %676 = dma.vmem_to_hbm [thread:$0]  %s674, 128, %s13, [#allocation4]
    $region81: #{tpu_custom_call.1} parent=1 // pred_fallthru
      _
    // Predicated region
    $region82: #{tpu_custom_call.1} parent=1 // pred_check
      _
    $region83: #{tpu_custom_call.1} parent=1 // pred_check_branch
      %678 = sbr.rel (0) target = $region85
    $region84: #{tpu_custom_call.1} parent=1 // pred_region
      %679 = dma.done [#allocation4], 128
    $region85: #{tpu_custom_call.1} parent=1 // pred_fallthru
      _
    %680 = vsyncpa [#allocation3], 1
    %681 = vsyncpa [#allocation6], 1
    %682 = vsyncpa [#allocation9], 1
    %683 = vsyncpa [#allocation12], 1
    %684 = vsyncpa [#allocation4], 1

</llo_original>
